<compile_context>
chip_gen: v5e
topology: v5e:2x2
jax: 0.10.0
libtpu: 0.0.40
codegen_flags: <defaults>
</compile_context>

<pallas_src>
import math
import functools

import jax
import jax.numpy as jnp
from jax import lax
from jax.experimental import pallas as pl
from jax.experimental.pallas import tpu as pltpu


def _mha_head_kernel(q_ref, k_ref, v_ref,
                     wq_ref, bq_ref, wk_ref, bk_ref, wv_ref, bv_ref,
                     *out_refs, scale, mxu_dtype, with_scores):
    """One grid step == one (batch, head) pair.

    q/k/v refs : (1, L, H)    in mxu_dtype (bf16 on v6e/v7x perf path)
    w*_refs    : (1, H, D)    per-head slice of the (pre-transposed) weight
    b*_refs    : (1, 1, D)    per-head bias, f32
    ctx_ref    : (1, 1, L, D) f32
    scores_ref : (1, 1, L, L) f32 (pre-softmax, scaled)   [optional]
    """
    ctx_ref = out_refs[0]
    scores_ref = out_refs[1] if with_scores else None

    q = q_ref[0]        # (L, H)
    k = k_ref[0]
    v = v_ref[0]

    # Per-head projections: (L, H) @ (H, D) -> (L, D), f32 accumulation on MXU.
    q_h = jnp.dot(q, wq_ref[0], preferred_element_type=jnp.float32) + bq_ref[0]
    k_h = jnp.dot(k, wk_ref[0], preferred_element_type=jnp.float32) + bk_ref[0]
    v_h = jnp.dot(v, wv_ref[0], preferred_element_type=jnp.float32) + bv_ref[0]

    # attention_scores = (q_h @ k_h^T) / sqrt(D); contract last dims directly
    # so no explicit XLU transpose is emitted.
    s = lax.dot_general(
        q_h.astype(mxu_dtype), k_h.astype(mxu_dtype),
        dimension_numbers=(((1,), (1,)), ((), ())),
        preferred_element_type=jnp.float32) * scale          # (L, L) f32

    if with_scores:
        scores_ref[0, 0] = s

    # Softmax along the last dim, kept in f32 (VPU + EUP).
    m = jnp.max(s, axis=-1, keepdims=True)
    p = jnp.exp(s - m)
    denom = jnp.sum(p, axis=-1, keepdims=True)
    use_approx = (mxu_dtype != jnp.float32)     # exact recip for f32 parity path
    p = p * pl.reciprocal(denom, approx=use_approx)

    # Dropout: eval-mode identity. attention_mask / head_mask: None (defaults).

    ctx = jnp.dot(p.astype(mxu_dtype), v_h.astype(mxu_dtype),
                  preferred_element_type=jnp.float32)          # (L, D)
    ctx_ref[0, 0] = ctx.astype(ctx_ref.dtype)


def multi_head_attention(query, key, value, params, *, num_heads,
                         return_attention_scores=True,
                         mxu_dtype=jnp.bfloat16):
    """query/key/value: [B, L, H] float32.  params: dict of projection weights.

    Returns (context,) or (context, attention_scores) like the torch module.
    """
    B, L, H = query.shape
    assert H % num_heads == 0
    D = H // num_heads

    # nn.Linear computes x @ W.T + b with W = (out, in) = (H, H).
    # Reshape to per-head (nH, H, D) slabs host-side (head h -> output columns
    # [h*D, (h+1)*D), matching PyTorch's view + permute(0,2,1,3) convention).
    def per_head_w(w):
        return w.reshape(num_heads, D, H).transpose(0, 2, 1).astype(mxu_dtype)

    def per_head_b(b):
        return b.reshape(num_heads, 1, D).astype(jnp.float32)

    wq, wk, wv = (per_head_w(params[n]) for n in ("wq", "wk", "wv"))
    bq, bk, bv = (per_head_b(params[n]) for n in ("bq", "bk", "bv"))

    q = query.astype(mxu_dtype)
    k = key.astype(mxu_dtype)
    v = value.astype(mxu_dtype)

    kernel = functools.partial(
        _mha_head_kernel,
        scale=1.0 / math.sqrt(D),
        mxu_dtype=mxu_dtype,
        with_scores=return_attention_scores)

    # q/k/v index_map is constant over the head axis -> blocks stay resident
    # across the inner (head) grid axis; no repeated HBM reads per head.
    seq_spec = pl.BlockSpec((1, L, H), lambda b, h: (b, 0, 0))
    w_spec = pl.BlockSpec((1, H, D), lambda b, h: (h, 0, 0))
    bias_spec = pl.BlockSpec((1, 1, D), lambda b, h: (h, 0, 0))

    out_shapes = [jax.ShapeDtypeStruct((B, num_heads, L, D), jnp.float32)]
    out_specs = [pl.BlockSpec((1, 1, L, D), lambda b, h: (b, h, 0, 0))]
    if return_attention_scores:
        out_shapes.append(jax.ShapeDtypeStruct((B, num_heads, L, L), jnp.float32))
        out_specs.append(pl.BlockSpec((1, 1, L, L), lambda b, h: (b, h, 0, 0)))

    outs = pl.pallas_call(
        kernel,
        out_shape=tuple(out_shapes),
        grid_spec=pltpu.PrefetchScalarGridSpec(
            num_scalar_prefetch=0,
            grid=(B, num_heads),
            in_specs=[seq_spec, seq_spec, seq_spec,
                      w_spec, bias_spec, w_spec, bias_spec, w_spec, bias_spec],
            out_specs=out_specs,
        ),
        compiler_params=pltpu.CompilerParams(
            dimension_semantics=("parallel", "parallel")),
    )(q, k, v, wq, bq, wk, bk, wv, bv)

    ctx_heads = outs[0]                                    # (B, nH, L, D)
    # permute(0,2,1,3).contiguous().view(B, L, H) -- wrapper-side layout plumbing.
    context = ctx_heads.transpose(0, 2, 1, 3).reshape(B, L, H)
    if return_attention_scores:
        return context, outs[1]
    return (context,)


def _reference(query, key, value, params, *, num_heads):
    """Pure-JAX reference mirroring the PyTorch forward (eval-mode dropout)."""
    B, L, H = query.shape
    D = H // num_heads

    def lin(x, w, b):
        return x @ w.T + b

    def split_heads(x):
        return x.reshape(B, L, num_heads, D).transpose(0, 2, 1, 3)

    q = split_heads(lin(query, params["wq"], params["bq"]))
    k = split_heads(lin(key, params["wk"], params["bk"]))
    v = split_heads(lin(value, params["wv"], params["bv"]))

    scores = jnp.einsum("bhqd,bhkd->bhqk", q, k) / math.sqrt(D)
    probs = jax.nn.softmax(scores, axis=-1)
    ctx = jnp.einsum("bhqk,bhkd->bhqd", probs, v)
    ctx = ctx.transpose(0, 2, 1, 3).reshape(B, L, H)
    return ctx, scores


if __name__ == "__main__":
    B, L, H, NH = 2, 8, 32, 4

    root = jax.random.PRNGKey(0)
    k_q, k_k, k_v, k_wq, k_wk, k_wv, k_bq, k_bk, k_bv = jax.random.split(root, 9)

    query = jax.random.normal(k_q, (B, L, H), dtype=jnp.float32)
    key = jax.random.normal(k_k, (B, L, H), dtype=jnp.float32)
    value = jax.random.normal(k_v, (B, L, H), dtype=jnp.float32)

    scale = 1.0 / math.sqrt(H)
    params = {
        "wq": jax.random.uniform(k_wq, (H, H), jnp.float32, -scale, scale),
        "wk": jax.random.uniform(k_wk, (H, H), jnp.float32, -scale, scale),
        "wv": jax.random.uniform(k_wv, (H, H), jnp.float32, -scale, scale),
        "bq": jax.random.uniform(k_bq, (H,), jnp.float32, -scale, scale),
        "bk": jax.random.uniform(k_bk, (H,), jnp.float32, -scale, scale),
        "bv": jax.random.uniform(k_bv, (H,), jnp.float32, -scale, scale),
    }

    ctx_ref, scores_ref = _reference(query, key, value, params, num_heads=NH)

    # 1) strict numerical parity path (f32 MXU operands, exact reciprocal)
    ctx32, sc32 = multi_head_attention(
        query, key, value, params, num_heads=NH,
        return_attention_scores=True, mxu_dtype=jnp.float32)
    jax.block_until_ready(ctx32)
    jax.block_until_ready(sc32)
    assert jnp.allclose(ctx32, ctx_ref, atol=1e-4, rtol=1e-4), "context mismatch (f32)"
    assert jnp.allclose(sc32, scores_ref, atol=1e-4, rtol=1e-4), "scores mismatch (f32)"

    # 2) perf path (bf16 MXU operands, f32 accumulation/softmax)
    ctx_bf, sc_bf = multi_head_attention(
        query, key, value, params, num_heads=NH,
        return_attention_scores=True, mxu_dtype=jnp.bfloat16)
    jax.block_until_ready(ctx_bf)
    jax.block_until_ready(sc_bf)
    assert jnp.allclose(ctx_bf, ctx_ref, atol=2e-2, rtol=2e-2), "context mismatch (bf16)"
    assert jnp.allclose(sc_bf, scores_ref, atol=2e-2, rtol=2e-2), "scores mismatch (bf16)"

    print("KERNEL_OK")
</pallas_src>

<mosaic_0001>
module attributes {stable_mosaic.version = 11 : i64} {
  func.func @_mha_head_kernel(%arg0: i32, %arg1: i32, %arg2: memref<1x8x32xf32, #tpu.memory_space<vmem>>, %arg3: memref<1x8x32xf32, #tpu.memory_space<vmem>>, %arg4: memref<1x8x32xf32, #tpu.memory_space<vmem>>, %arg5: memref<1x32x8xf32, #tpu.memory_space<vmem>>, %arg6: memref<1x1x8xf32, #tpu.memory_space<vmem>>, %arg7: memref<1x32x8xf32, #tpu.memory_space<vmem>>, %arg8: memref<1x1x8xf32, #tpu.memory_space<vmem>>, %arg9: memref<1x32x8xf32, #tpu.memory_space<vmem>>, %arg10: memref<1x1x8xf32, #tpu.memory_space<vmem>>, %arg11: memref<1x1x8x8xf32, #tpu.memory_space<vmem>>, %arg12: memref<1x1x8x8xf32, #tpu.memory_space<vmem>>) attributes {dimension_semantics = [#tpu.dimension_semantics<parallel>, #tpu.dimension_semantics<parallel>], iteration_bounds = array<i64: 2, 4>, scalar_prefetch = 0 : i64, scratch_operands = 0 : i64, tpu.core_type = #tpu.core_type<tc>, window_params = [{transform_indices = @transform_0, window_bounds = array<i64: 1, 8, 32>}, {transform_indices = @transform_1, window_bounds = array<i64: 1, 8, 32>}, {transform_indices = @transform_2, window_bounds = array<i64: 1, 8, 32>}, {transform_indices = @transform_3, window_bounds = array<i64: 1, 32, 8>}, {transform_indices = @transform_4, window_bounds = array<i64: 1, 1, 8>}, {transform_indices = @transform_5, window_bounds = array<i64: 1, 32, 8>}, {transform_indices = @transform_6, window_bounds = array<i64: 1, 1, 8>}, {transform_indices = @transform_7, window_bounds = array<i64: 1, 32, 8>}, {transform_indices = @transform_8, window_bounds = array<i64: 1, 1, 8>}, {transform_indices = @transform_9, window_bounds = array<i64: 1, 1, 8, 8>}, {transform_indices = @transform_10, window_bounds = array<i64: 1, 1, 8, 8>}]} {
    %c0 = arith.constant 0 : index
    %c0_0 = arith.constant 0 : index
    %c0_1 = arith.constant 0 : index
    %0 = vector.load %arg2[%c0, %c0_0, %c0_1] : memref<1x8x32xf32, #tpu.memory_space<vmem>>, vector<1x8x32xf32>
    %1 = vector.shape_cast %0 : vector<1x8x32xf32> to vector<8x32xf32>
    %c0_2 = arith.constant 0 : index
    %c0_3 = arith.constant 0 : index
    %c0_4 = arith.constant 0 : index
    %2 = vector.load %arg3[%c0_2, %c0_3, %c0_4] : memref<1x8x32xf32, #tpu.memory_space<vmem>>, vector<1x8x32xf32>
    %3 = vector.shape_cast %2 : vector<1x8x32xf32> to vector<8x32xf32>
    %c0_5 = arith.constant 0 : index
    %c0_6 = arith.constant 0 : index
    %c0_7 = arith.constant 0 : index
    %4 = vector.load %arg4[%c0_5, %c0_6, %c0_7] : memref<1x8x32xf32, #tpu.memory_space<vmem>>, vector<1x8x32xf32>
    %5 = vector.shape_cast %4 : vector<1x8x32xf32> to vector<8x32xf32>
    %c0_8 = arith.constant 0 : index
    %c0_9 = arith.constant 0 : index
    %c0_10 = arith.constant 0 : index
    %6 = vector.load %arg5[%c0_8, %c0_9, %c0_10] : memref<1x32x8xf32, #tpu.memory_space<vmem>>, vector<1x32x8xf32>
    %7 = vector.shape_cast %6 : vector<1x32x8xf32> to vector<32x8xf32>
    %cst = arith.constant dense<0.000000e+00> : vector<8x8xf32>
    %8 = tpu.matmul %1, %7, %cst {dimension_numbers = #tpu.dot_dimension_numbers<[1], [0], [0], [1], [0, 0, 1, 1], [], []>} : vector<8x32xf32>, vector<32x8xf32>, vector<8x8xf32> -> vector<8x8xf32>
    %c0_11 = arith.constant 0 : index
    %c0_12 = arith.constant 0 : index
    %c0_13 = arith.constant 0 : index
    %9 = vector.load %arg6[%c0_11, %c0_12, %c0_13] : memref<1x1x8xf32, #tpu.memory_space<vmem>>, vector<1x1x8xf32>
    %10 = vector.shape_cast %9 : vector<1x1x8xf32> to vector<1x8xf32>
    %11 = vector.broadcast %10 : vector<1x8xf32> to vector<8x8xf32>
    %12 = arith.addf %8, %11 : vector<8x8xf32>
    %c0_14 = arith.constant 0 : index
    %c0_15 = arith.constant 0 : index
    %c0_16 = arith.constant 0 : index
    %13 = vector.load %arg7[%c0_14, %c0_15, %c0_16] : memref<1x32x8xf32, #tpu.memory_space<vmem>>, vector<1x32x8xf32>
    %14 = vector.shape_cast %13 : vector<1x32x8xf32> to vector<32x8xf32>
    %cst_17 = arith.constant dense<0.000000e+00> : vector<8x8xf32>
    %15 = tpu.matmul %3, %14, %cst_17 {dimension_numbers = #tpu.dot_dimension_numbers<[1], [0], [0], [1], [0, 0, 1, 1], [], []>} : vector<8x32xf32>, vector<32x8xf32>, vector<8x8xf32> -> vector<8x8xf32>
    %c0_18 = arith.constant 0 : index
    %c0_19 = arith.constant 0 : index
    %c0_20 = arith.constant 0 : index
    %16 = vector.load %arg8[%c0_18, %c0_19, %c0_20] : memref<1x1x8xf32, #tpu.memory_space<vmem>>, vector<1x1x8xf32>
    %17 = vector.shape_cast %16 : vector<1x1x8xf32> to vector<1x8xf32>
    %18 = vector.broadcast %17 : vector<1x8xf32> to vector<8x8xf32>
    %19 = arith.addf %15, %18 : vector<8x8xf32>
    %c0_21 = arith.constant 0 : index
    %c0_22 = arith.constant 0 : index
    %c0_23 = arith.constant 0 : index
    %20 = vector.load %arg9[%c0_21, %c0_22, %c0_23] : memref<1x32x8xf32, #tpu.memory_space<vmem>>, vector<1x32x8xf32>
    %21 = vector.shape_cast %20 : vector<1x32x8xf32> to vector<32x8xf32>
    %cst_24 = arith.constant dense<0.000000e+00> : vector<8x8xf32>
    %22 = tpu.matmul %5, %21, %cst_24 {dimension_numbers = #tpu.dot_dimension_numbers<[1], [0], [0], [1], [0, 0, 1, 1], [], []>} : vector<8x32xf32>, vector<32x8xf32>, vector<8x8xf32> -> vector<8x8xf32>
    %c0_25 = arith.constant 0 : index
    %c0_26 = arith.constant 0 : index
    %c0_27 = arith.constant 0 : index
    %23 = vector.load %arg10[%c0_25, %c0_26, %c0_27] : memref<1x1x8xf32, #tpu.memory_space<vmem>>, vector<1x1x8xf32>
    %24 = vector.shape_cast %23 : vector<1x1x8xf32> to vector<1x8xf32>
    %25 = vector.broadcast %24 : vector<1x8xf32> to vector<8x8xf32>
    %26 = arith.addf %22, %25 : vector<8x8xf32>
    %cst_28 = arith.constant dense<0.000000e+00> : vector<8x8xf32>
    %27 = tpu.matmul %12, %19, %cst_28 {dimension_numbers = #tpu.dot_dimension_numbers<[1], [1], [0], [0], [0, 0, 1, 0], [], []>} : vector<8x8xf32>, vector<8x8xf32>, vector<8x8xf32> -> vector<8x8xf32>
    %cst_29 = arith.constant 0.353553385 : f32
    %28 = vector.broadcast %cst_29 : f32 to vector<8x8xf32>
    %29 = arith.mulf %27, %28 : vector<8x8xf32>
    %c0_30 = arith.constant 0 : index
    %c0_31 = arith.constant 0 : index
    %c0_32 = arith.constant 0 : index
    %c0_33 = arith.constant 0 : index
    %30 = vector.load %arg12[%c0_30, %c0_31, %c0_32, %c0_33] : memref<1x1x8x8xf32, #tpu.memory_space<vmem>>, vector<1x1x8x8xf32>
    %31 = vector.shape_cast %30 : vector<1x1x8x8xf32> to vector<8x8xf32>
    %32 = vector.shape_cast %29 : vector<8x8xf32> to vector<1x1x8x8xf32>
    tpu.vector_store %arg12[%c0_30, %c0_31, %c0_32, %c0_33], %32 {strides = array<i32>} : memref<1x1x8x8xf32, #tpu.memory_space<vmem>>, vector<1x1x8x8xf32>,
    %cst_34 = arith.constant dense<0xFF800000> : vector<8xf32>
    %33 = vector.multi_reduction <maximumf>, %29, %cst_34 [1] : vector<8x8xf32> to vector<8xf32>
    %34 = vector.shape_cast %33 : vector<8xf32> to vector<8x1xf32>
    %35 = vector.broadcast %34 : vector<8x1xf32> to vector<8x8xf32>
    %36 = arith.subf %29, %35 : vector<8x8xf32>
    %37 = math.exp %36 : vector<8x8xf32>
    %cst_35 = arith.constant dense<0.000000e+00> : vector<8xf32>
    %38 = vector.multi_reduction <add>, %37, %cst_35 [1] : vector<8x8xf32> to vector<8xf32>
    %39 = vector.shape_cast %38 : vector<8xf32> to vector<8x1xf32>
    %40 = tpu.reciprocal %39 : vector<8x1xf32> -> vector<8x1xf32>
    %41 = vector.broadcast %40 : vector<8x1xf32> to vector<8x8xf32>
    %42 = arith.mulf %37, %41 : vector<8x8xf32>
    %cst_36 = arith.constant dense<0.000000e+00> : vector<8x8xf32>
    %43 = tpu.matmul %42, %26, %cst_36 {dimension_numbers = #tpu.dot_dimension_numbers<[1], [0], [0], [1], [0, 0, 1, 1], [], []>} : vector<8x8xf32>, vector<8x8xf32>, vector<8x8xf32> -> vector<8x8xf32>
    %c0_37 = arith.constant 0 : index
    %c0_38 = arith.constant 0 : index
    %c0_39 = arith.constant 0 : index
    %c0_40 = arith.constant 0 : index
    %44 = vector.load %arg11[%c0_37, %c0_38, %c0_39, %c0_40] : memref<1x1x8x8xf32, #tpu.memory_space<vmem>>, vector<1x1x8x8xf32>
    %45 = vector.shape_cast %44 : vector<1x1x8x8xf32> to vector<8x8xf32>
    %46 = vector.shape_cast %43 : vector<8x8xf32> to vector<1x1x8x8xf32>
    tpu.vector_store %arg11[%c0_37, %c0_38, %c0_39, %c0_40], %46 {strides = array<i32>} : memref<1x1x8x8xf32, #tpu.memory_space<vmem>>, vector<1x1x8x8xf32>,
    return
  }
  func.func @transform_0(%arg0: i32, %arg1: i32) -> (i32, i32, i32) {
    %c0_i32 = arith.constant 0 : i32
    %c0_i32_0 = arith.constant 0 : i32
    %c0_i32_1 = arith.constant 0 : i32
    return %arg0, %c0_i32, %c0_i32_0 : i32, i32, i32
  }
  func.func @transform_1(%arg0: i32, %arg1: i32) -> (i32, i32, i32) {
    %c0_i32 = arith.constant 0 : i32
    %c0_i32_0 = arith.constant 0 : i32
    %c0_i32_1 = arith.constant 0 : i32
    return %arg0, %c0_i32, %c0_i32_0 : i32, i32, i32
  }
  func.func @transform_2(%arg0: i32, %arg1: i32) -> (i32, i32, i32) {
    %c0_i32 = arith.constant 0 : i32
    %c0_i32_0 = arith.constant 0 : i32
    %c0_i32_1 = arith.constant 0 : i32
    return %arg0, %c0_i32, %c0_i32_0 : i32, i32, i32
  }
  func.func @transform_3(%arg0: i32, %arg1: i32) -> (i32, i32, i32) {
    %c0_i32 = arith.constant 0 : i32
    %c0_i32_0 = arith.constant 0 : i32
    %c0_i32_1 = arith.constant 0 : i32
    return %arg1, %c0_i32, %c0_i32_0 : i32, i32, i32
  }
  func.func @transform_4(%arg0: i32, %arg1: i32) -> (i32, i32, i32) {
    %c0_i32 = arith.constant 0 : i32
    %c0_i32_0 = arith.constant 0 : i32
    %c0_i32_1 = arith.constant 0 : i32
    return %arg1, %c0_i32, %c0_i32_0 : i32, i32, i32
  }
  func.func @transform_5(%arg0: i32, %arg1: i32) -> (i32, i32, i32) {
    %c0_i32 = arith.constant 0 : i32
    %c0_i32_0 = arith.constant 0 : i32
    %c0_i32_1 = arith.constant 0 : i32
    return %arg1, %c0_i32, %c0_i32_0 : i32, i32, i32
  }
  func.func @transform_6(%arg0: i32, %arg1: i32) -> (i32, i32, i32) {
    %c0_i32 = arith.constant 0 : i32
    %c0_i32_0 = arith.constant 0 : i32
    %c0_i32_1 = arith.constant 0 : i32
    return %arg1, %c0_i32, %c0_i32_0 : i32, i32, i32
  }
  func.func @transform_7(%arg0: i32, %arg1: i32) -> (i32, i32, i32) {
    %c0_i32 = arith.constant 0 : i32
    %c0_i32_0 = arith.constant 0 : i32
    %c0_i32_1 = arith.constant 0 : i32
    return %arg1, %c0_i32, %c0_i32_0 : i32, i32, i32
  }
  func.func @transform_8(%arg0: i32, %arg1: i32) -> (i32, i32, i32) {
    %c0_i32 = arith.constant 0 : i32
    %c0_i32_0 = arith.constant 0 : i32
    %c0_i32_1 = arith.constant 0 : i32
    return %arg1, %c0_i32, %c0_i32_0 : i32, i32, i32
  }
  func.func @transform_9(%arg0: i32, %arg1: i32) -> (i32, i32, i32, i32) {
    %c0_i32 = arith.constant 0 : i32
    %c0_i32_0 = arith.constant 0 : i32
    %c0_i32_1 = arith.constant 0 : i32
    return %arg0, %arg1, %c0_i32, %c0_i32_0 : i32, i32, i32, i32
  }
  func.func @transform_10(%arg0: i32, %arg1: i32) -> (i32, i32, i32, i32) {
    %c0_i32 = arith.constant 0 : i32
    %c0_i32_0 = arith.constant 0 : i32
    %c0_i32_1 = arith.constant 0 : i32
    return %arg0, %arg1, %c0_i32, %c0_i32_0 : i32, i32, i32, i32
  }
}

</mosaic_0001>

<llo_original>
// kernel: tpu_custom_call.1
$region0: #{tpu_custom_call.1}
  #allocation0 [shape = 'u32[]', space=smem, size = 0x4, offset = 0x4, fixed_abs, tag = 'smem constant byte address 0x4 - core index']
  #allocation1 [shape = 'u32[72,128]{1,0:T(1,128)}', space=vmem, size = 0x9000, scoped, tag = 'internal scratch']
  %s0 = inlined_call_operand.vmem [shape: f32[2,8,32], index: 0, kind: input, shape index: {}]
  %s1 = inlined_call_operand.vmem [shape: f32[2,8,32], index: 1, kind: input, shape index: {}]
  %s2 = inlined_call_operand.vmem [shape: f32[2,8,32], index: 2, kind: input, shape index: {}]
  %s3 = inlined_call_operand.vmem [shape: f32[4,32,8], index: 3, kind: input, shape index: {}]
  %s4 = inlined_call_operand.vmem [shape: f32[4,1,8], index: 4, kind: input, shape index: {}]
  %s5 = inlined_call_operand.vmem [shape: f32[4,32,8], index: 5, kind: input, shape index: {}]
  %s6 = inlined_call_operand.vmem [shape: f32[4,1,8], index: 6, kind: input, shape index: {}]
  %s7 = inlined_call_operand.vmem [shape: f32[4,32,8], index: 7, kind: input, shape index: {}]
  %s8 = inlined_call_operand.vmem [shape: f32[4,1,8], index: 8, kind: input, shape index: {}]
  %s9 = inlined_call_operand.hbm [shape: f32[2,4,8,8], index: 9, kind: output, shape index: {0}]
  %s10 = inlined_call_operand.hbm [shape: f32[2,4,8,8], index: 10, kind: output, shape index: {1}]
  %11 = xla_tuple %s9, %s10
  %s12 = sld [smem:[#allocation0]]
  $region77: #{tpu_custom_call.1} parent=0
    _
  %s14 = ssub.s32 1, %s12
  %s15 = scalar_select 0, %s14, %s12
  $region1: #{tpu_custom_call.1} parent=0
    #allocation2 [shape = 'u8[8192]{0}', space=vmem, size = 0x2000, scoped, tag = 'output window, operand 0']
    #allocation3 [shape = 's32[2]{0}', space=sflag, size = 0x8, scoped, tag = 'scoped memory for tpu_custom_call.1']
    #allocation4 [shape = 'u8[8192]{0}', space=vmem, size = 0x2000, scoped, tag = 'output window, operand 1']
    #allocation5 [shape = 's32[2]{0}', space=sflag, size = 0x8, scoped, tag = 'scoped memory for tpu_custom_call.1']
    %16 = vsyncpa [#allocation3], 0
    %s17 = scalar_lea.sflag [#allocation3], 1
    %18 = vsyncpa %s17, 0
    %19 = vsyncpa [#allocation5], 0
    %s20 = scalar_lea.sflag [#allocation5], 1
    %21 = vsyncpa %s20, 0
    loop: start=0, step=1, limit=10
    $region2: #{tpu_custom_call.1} parent=1 // loop_pre_header
      _
    $region3: #{tpu_custom_call.1} parent=1 // loop_header
      %s23 = sphi 0, %s27
      %p24 = scmp.ge.s32.totalorder %s23, 10
      %s30 = sphi 0, %s42
      %s31 = sphi 0, %s38
      %s32 = sphi 0, %s30
      %s33 = sphi 0, %s31
      %s34 = sphi 0, %s32
      %s35 = sphi 0, %s33
      %s45 = sphi 0, %s47
      %s48 = sphi 0, %s45
      %s49 = sphi 0, %s48
      %s65 = sphi 0, %s49
      %s71 = sphi 0, %s73
      %s74 = sphi 0, %s71
      %s75 = sphi 0, %s74
      %s91 = sphi 0, %s75
      %s97 = sphi 0, %s99
      %s100 = sphi 0, %s97
      %s101 = sphi 0, %s100
      %s117 = sphi 0, %s101
      %s123 = sphi 0, %s125
      %s126 = sphi 0, %s123
      %s127 = sphi 0, %s126
      %s143 = sphi 0, %s127
      %s149 = sphi 0, %s151
      %s152 = sphi 0, %s149
      %s153 = sphi 0, %s152
      %s169 = sphi 0, %s153
      %s175 = sphi 0, %s177
      %s178 = sphi 0, %s175
      %s179 = sphi 0, %s178
      %s195 = sphi 0, %s179
      %s201 = sphi 0, %s203
      %s204 = sphi 0, %s201
      %s205 = sphi 0, %s204
      %s221 = sphi 0, %s205
      %s227 = sphi 0, %s229
      %s230 = sphi 0, %s227
      %s231 = sphi 0, %s230
      %s247 = sphi 0, %s231
      %s253 = sphi 0, %s255
      %s256 = sphi 0, %s253
      %s257 = sphi 0, %s256
      %s273 = sphi 0, %s257
      %s281 = sphi 0, %s283
      %s284 = sphi 0, %s281
      %s285 = sphi 0, %s284
      %s301 = sphi 0, %s285
      %s309 = sphi 0, %s311
      %s312 = sphi 0, %s309
      %s313 = sphi 0, %s312
      %s329 = sphi 0, %s313
    $region4: #{tpu_custom_call.1} parent=1 // loop_header_branch
      %26 = sbr.rel (%p24) target = $region8
    $region5: #{tpu_custom_call.1} parent=1 // loop_body
      %s28 = ssub.s32 %s23, 1
      %s29 = ssub.s32 %s23, 2
      %s36 = sadd.s32 1, %s31
      %p37 = scmp.ge.s32.totalorder %s36, 4
      %s38 = scalar_select %p37, 0, %s36
      %s39 = sadd.s32 1, %s30
      %s40 = scalar_select %p37, %s39, %s30
      %p41 = scmp.ge.s32.totalorder %s40, 2
      %s42 = scalar_select %p41, 0, %s40
      %s43 = ssub.s32 %s30, %s42
      %p44 = scmp.eq.s32.totalorder %s43, 0
      %s46 = sadd.s32 %s45, 1
      %s47 = scalar_select %p44, %s45, %s46
      %p50 = pneg %p44
      %p51 = scmp.eq.s32.totalorder %s23, 7
      %p52 = por %p50, %p51
      %p53 = scmp.ne.s32.totalorder %s45, %s48
      %p54 = scmp.eq.s32.totalorder %s23, 0
      %p55 = por %p53, %p54
      %p56 = scmp.ne.s32.totalorder %s45, %s48
      %p57 = scmp.eq.s32.totalorder %s28, 7
      %p58 = por %p56, %p57
      %p59 = scmp.ne.s32.totalorder %s48, %s49
      %p60 = scmp.eq.s32.totalorder %s28, 0
      %p61 = por %p59, %p60
      %p62 = scmp.ne.s32.totalorder %s48, %s49
      %p63 = scmp.eq.s32.totalorder %s29, 7
      %p64 = por %p62, %p63
      %p66 = scmp.ne.s32.totalorder %s49, %s65
      %p67 = scmp.eq.s32.totalorder %s29, 0
      %p68 = por %p66, %p67
      %s69 = ssub.s32 %s30, %s42
      %p70 = scmp.eq.s32.totalorder %s69, 0
      %s72 = sadd.s32 %s71, 1
      %s73 = scalar_select %p70, %s71, %s72
      %p76 = pneg %p70
      %p77 = scmp.eq.s32.totalorder %s23, 7
      %p78 = por %p76, %p77
      %p79 = scmp.ne.s32.totalorder %s71, %s74
      %p80 = scmp.eq.s32.totalorder %s23, 0
      %p81 = por %p79, %p80
      %p82 = scmp.ne.s32.totalorder %s71, %s74
      %p83 = scmp.eq.s32.totalorder %s28, 7
      %p84 = por %p82, %p83
      %p85 = scmp.ne.s32.totalorder %s74, %s75
      %p86 = scmp.eq.s32.totalorder %s28, 0
      %p87 = por %p85, %p86
      %p88 = scmp.ne.s32.totalorder %s74, %s75
      %p89 = scmp.eq.s32.totalorder %s29, 7
      %p90 = por %p88, %p89
      %p92 = scmp.ne.s32.totalorder %s75, %s91
      %p93 = scmp.eq.s32.totalorder %s29, 0
      %p94 = por %p92, %p93
      %s95 = ssub.s32 %s30, %s42
      %p96 = scmp.eq.s32.totalorder %s95, 0
      %s98 = sadd.s32 %s97, 1
      %s99 = scalar_select %p96, %s97, %s98
      %p102 = pneg %p96
      %p103 = scmp.eq.s32.totalorder %s23, 7
      %p104 = por %p102, %p103
      %p105 = scmp.ne.s32.totalorder %s97, %s100
      %p106 = scmp.eq.s32.totalorder %s23, 0
      %p107 = por %p105, %p106
      %p108 = scmp.ne.s32.totalorder %s97, %s100
      %p109 = scmp.eq.s32.totalorder %s28, 7
      %p110 = por %p108, %p109
      %p111 = scmp.ne.s32.totalorder %s100, %s101
      %p112 = scmp.eq.s32.totalorder %s28, 0
      %p113 = por %p111, %p112
      %p114 = scmp.ne.s32.totalorder %s100, %s101
      %p115 = scmp.eq.s32.totalorder %s29, 7
      %p116 = por %p114, %p115
      %p118 = scmp.ne.s32.totalorder %s101, %s117
      %p119 = scmp.eq.s32.totalorder %s29, 0
      %p120 = por %p118, %p119
      %s121 = ssub.s32 %s31, %s38
      %p122 = scmp.eq.s32.totalorder %s121, 0
      %s124 = sadd.s32 %s123, 1
      %s125 = scalar_select %p122, %s123, %s124
      %p128 = pneg %p122
      %p129 = scmp.eq.s32.totalorder %s23, 7
      %p130 = por %p128, %p129
      %p131 = scmp.ne.s32.totalorder %s123, %s126
      %p132 = scmp.eq.s32.totalorder %s23, 0
      %p133 = por %p131, %p132
      %p134 = scmp.ne.s32.totalorder %s123, %s126
      %p135 = scmp.eq.s32.totalorder %s28, 7
      %p136 = por %p134, %p135
      %p137 = scmp.ne.s32.totalorder %s126, %s127
      %p138 = scmp.eq.s32.totalorder %s28, 0
      %p139 = por %p137, %p138
      %p140 = scmp.ne.s32.totalorder %s126, %s127
      %p141 = scmp.eq.s32.totalorder %s29, 7
      %p142 = por %p140, %p141
      %p144 = scmp.ne.s32.totalorder %s127, %s143
      %p145 = scmp.eq.s32.totalorder %s29, 0
      %p146 = por %p144, %p145
      %s147 = ssub.s32 %s31, %s38
      %p148 = scmp.eq.s32.totalorder %s147, 0
      %s150 = sadd.s32 %s149, 1
      %s151 = scalar_select %p148, %s149, %s150
      %p154 = pneg %p148
      %p155 = scmp.eq.s32.totalorder %s23, 7
      %p156 = por %p154, %p155
      %p157 = scmp.ne.s32.totalorder %s149, %s152
      %p158 = scmp.eq.s32.totalorder %s23, 0
      %p159 = por %p157, %p158
      %p160 = scmp.ne.s32.totalorder %s149, %s152
      %p161 = scmp.eq.s32.totalorder %s28, 7
      %p162 = por %p160, %p161
      %p163 = scmp.ne.s32.totalorder %s152, %s153
      %p164 = scmp.eq.s32.totalorder %s28, 0
      %p165 = por %p163, %p164
      %p166 = scmp.ne.s32.totalorder %s152, %s153
      %p167 = scmp.eq.s32.totalorder %s29, 7
      %p168 = por %p166, %p167
      %p170 = scmp.ne.s32.totalorder %s153, %s169
      %p171 = scmp.eq.s32.totalorder %s29, 0
      %p172 = por %p170, %p171
      %s173 = ssub.s32 %s31, %s38
      %p174 = scmp.eq.s32.totalorder %s173, 0
      %s176 = sadd.s32 %s175, 1
      %s177 = scalar_select %p174, %s175, %s176
      %p180 = pneg %p174
      %p181 = scmp.eq.s32.totalorder %s23, 7
      %p182 = por %p180, %p181
      %p183 = scmp.ne.s32.totalorder %s175, %s178
      %p184 = scmp.eq.s32.totalorder %s23, 0
      %p185 = por %p183, %p184
      %p186 = scmp.ne.s32.totalorder %s175, %s178
      %p187 = scmp.eq.s32.totalorder %s28, 7
      %p188 = por %p186, %p187
      %p189 = scmp.ne.s32.totalorder %s178, %s179
      %p190 = scmp.eq.s32.totalorder %s28, 0
      %p191 = por %p189, %p190
      %p192 = scmp.ne.s32.totalorder %s178, %s179
      %p193 = scmp.eq.s32.totalorder %s29, 7
      %p194 = por %p192, %p193
      %p196 = scmp.ne.s32.totalorder %s179, %s195
      %p197 = scmp.eq.s32.totalorder %s29, 0
      %p198 = por %p196, %p197
      %s199 = ssub.s32 %s31, %s38
      %p200 = scmp.eq.s32.totalorder %s199, 0
      %s202 = sadd.s32 %s201, 1
      %s203 = scalar_select %p200, %s201, %s202
      %p206 = pneg %p200
      %p207 = scmp.eq.s32.totalorder %s23, 7
      %p208 = por %p206, %p207
      %p209 = scmp.ne.s32.totalorder %s201, %s204
      %p210 = scmp.eq.s32.totalorder %s23, 0
      %p211 = por %p209, %p210
      %p212 = scmp.ne.s32.totalorder %s201, %s204
      %p213 = scmp.eq.s32.totalorder %s28, 7
      %p214 = por %p212, %p213
      %p215 = scmp.ne.s32.totalorder %s204, %s205
      %p216 = scmp.eq.s32.totalorder %s28, 0
      %p217 = por %p215, %p216
      %p218 = scmp.ne.s32.totalorder %s204, %s205
      %p219 = scmp.eq.s32.totalorder %s29, 7
      %p220 = por %p218, %p219
      %p222 = scmp.ne.s32.totalorder %s205, %s221
      %p223 = scmp.eq.s32.totalorder %s29, 0
      %p224 = por %p222, %p223
      %s225 = ssub.s32 %s31, %s38
      %p226 = scmp.eq.s32.totalorder %s225, 0
      %s228 = sadd.s32 %s227, 1
      %s229 = scalar_select %p226, %s227, %s228
      %p232 = pneg %p226
      %p233 = scmp.eq.s32.totalorder %s23, 7
      %p234 = por %p232, %p233
      %p235 = scmp.ne.s32.totalorder %s227, %s230
      %p236 = scmp.eq.s32.totalorder %s23, 0
      %p237 = por %p235, %p236
      %p238 = scmp.ne.s32.totalorder %s227, %s230
      %p239 = scmp.eq.s32.totalorder %s28, 7
      %p240 = por %p238, %p239
      %p241 = scmp.ne.s32.totalorder %s230, %s231
      %p242 = scmp.eq.s32.totalorder %s28, 0
      %p243 = por %p241, %p242
      %p244 = scmp.ne.s32.totalorder %s230, %s231
      %p245 = scmp.eq.s32.totalorder %s29, 7
      %p246 = por %p244, %p245
      %p248 = scmp.ne.s32.totalorder %s231, %s247
      %p249 = scmp.eq.s32.totalorder %s29, 0
      %p250 = por %p248, %p249
      %s251 = ssub.s32 %s31, %s38
      %p252 = scmp.eq.s32.totalorder %s251, 0
      %s254 = sadd.s32 %s253, 1
      %s255 = scalar_select %p252, %s253, %s254
      %p258 = pneg %p252
      %p259 = scmp.eq.s32.totalorder %s23, 7
      %p260 = por %p258, %p259
      %p261 = scmp.ne.s32.totalorder %s253, %s256
      %p262 = scmp.eq.s32.totalorder %s23, 0
      %p263 = por %p261, %p262
      %p264 = scmp.ne.s32.totalorder %s253, %s256
      %p265 = scmp.eq.s32.totalorder %s28, 7
      %p266 = por %p264, %p265
      %p267 = scmp.ne.s32.totalorder %s256, %s257
      %p268 = scmp.eq.s32.totalorder %s28, 0
      %p269 = por %p267, %p268
      %p270 = scmp.ne.s32.totalorder %s256, %s257
      %p271 = scmp.eq.s32.totalorder %s29, 7
      %p272 = por %p270, %p271
      %p274 = scmp.ne.s32.totalorder %s257, %s273
      %p275 = scmp.eq.s32.totalorder %s29, 0
      %p276 = por %p274, %p275
      %s277 = ssub.s32 %s30, %s42
      %s278 = ssub.s32 %s31, %s38
      %s279 = sor.u32 %s277, %s278
      %p280 = scmp.eq.s32.totalorder %s279, 0
      %s282 = sadd.s32 %s281, 1
      %s283 = scalar_select %p280, %s281, %s282
      %p286 = pneg %p280
      %p287 = scmp.eq.s32.totalorder %s23, 7
      %p288 = por %p286, %p287
      %p289 = scmp.ne.s32.totalorder %s281, %s284
      %p290 = scmp.eq.s32.totalorder %s23, 0
      %p291 = por %p289, %p290
      %p292 = scmp.ne.s32.totalorder %s281, %s284
      %p293 = scmp.eq.s32.totalorder %s28, 7
      %p294 = por %p292, %p293
      %p295 = scmp.ne.s32.totalorder %s284, %s285
      %p296 = scmp.eq.s32.totalorder %s28, 0
      %p297 = por %p295, %p296
      %p298 = scmp.ne.s32.totalorder %s284, %s285
      %p299 = scmp.eq.s32.totalorder %s29, 7
      %p300 = por %p298, %p299
      %p302 = scmp.ne.s32.totalorder %s285, %s301
      %p303 = scmp.eq.s32.totalorder %s29, 0
      %p304 = por %p302, %p303
      %s305 = ssub.s32 %s30, %s42
      %s306 = ssub.s32 %s31, %s38
      %s307 = sor.u32 %s305, %s306
      %p308 = scmp.eq.s32.totalorder %s307, 0
      %s310 = sadd.s32 %s309, 1
      %s311 = scalar_select %p308, %s309, %s310
      %p314 = pneg %p308
      %p315 = scmp.eq.s32.totalorder %s23, 7
      %p316 = por %p314, %p315
      %p317 = scmp.ne.s32.totalorder %s309, %s312
      %p318 = scmp.eq.s32.totalorder %s23, 0
      %p319 = por %p317, %p318
      %p320 = scmp.ne.s32.totalorder %s309, %s312
      %p321 = scmp.eq.s32.totalorder %s28, 7
      %p322 = por %p320, %p321
      %p323 = scmp.ne.s32.totalorder %s312, %s313
      %p324 = scmp.eq.s32.totalorder %s28, 0
      %p325 = por %p323, %p324
      %p326 = scmp.ne.s32.totalorder %s312, %s313
      %p327 = scmp.eq.s32.totalorder %s29, 7
      %p328 = por %p326, %p327
      %p330 = scmp.ne.s32.totalorder %s313, %s329
      %p331 = scmp.eq.s32.totalorder %s29, 0
      %p332 = por %p330, %p331
      %p333 = scmp.le.s32.totalorder 1, %s23
      %p334 = scmp.lt.s32.totalorder %s23, 9
      %p335 = pnand %p333, %p334
      %p336 = pneg %p335
      // Predicated region
      $region9: #{tpu_custom_call.1} parent=5 // pred_check
        _
      $region10: #{tpu_custom_call.1} parent=5 // pred_check_branch
        %338 = sbr.rel (%p335) target = $region12
      $region11: #{tpu_custom_call.1} parent=5 // pred_region
        %s339 = ssub.s32 %s23, 1
      $region12: #{tpu_custom_call.1} parent=5 // pred_fallthru
        _
      %p340 = scmp.lt.s32.totalorder %s23, 8
      // Predicated region
      $region13: #{tpu_custom_call.1} parent=5 // pred_check
        %p341 = pneg %p340
      $region14: #{tpu_custom_call.1} parent=5 // pred_check_branch
        %343 = sbr.rel (%p341) target = $region16
      $region15: #{tpu_custom_call.1} parent=5 // pred_region
        // Predicated region
        $region17: #{tpu_custom_call.1} parent=15 // pred_check
          %p344 = pneg %p55
        $region18: #{tpu_custom_call.1} parent=15 // pred_check_branch
          %346 = sbr.rel (%p344) target = $region20
        $region19: #{tpu_custom_call.1} parent=15 // pred_region
          %p347 = scmp.lt.s32.totalorder %s30, 1
          %s348 = scalar_select %p347, %s30, 1
          %s349 = smul.addr %s348, 8
          %s350 = scalar_lea.vmem %s0, %s349
        $region20: #{tpu_custom_call.1} parent=15 // pred_fallthru
          _
        // Predicated region
        $region21: #{tpu_custom_call.1} parent=15 // pred_check
          %p351 = pneg %p81
        $region22: #{tpu_custom_call.1} parent=15 // pred_check_branch
          %353 = sbr.rel (%p351) target = $region24
        $region23: #{tpu_custom_call.1} parent=15 // pred_region
          %p354 = scmp.lt.s32.totalorder %s30, 1
          %s355 = scalar_select %p354, %s30, 1
          %s356 = smul.addr %s355, 8
          %s357 = scalar_lea.vmem %s1, %s356
        $region24: #{tpu_custom_call.1} parent=15 // pred_fallthru
          _
        // Predicated region
        $region25: #{tpu_custom_call.1} parent=15 // pred_check
          %p358 = pneg %p107
        $region26: #{tpu_custom_call.1} parent=15 // pred_check_branch
          %360 = sbr.rel (%p358) target = $region28
        $region27: #{tpu_custom_call.1} parent=15 // pred_region
          %p361 = scmp.lt.s32.totalorder %s30, 1
          %s362 = scalar_select %p361, %s30, 1
          %s363 = smul.addr %s362, 8
          %s364 = scalar_lea.vmem %s2, %s363
        $region28: #{tpu_custom_call.1} parent=15 // pred_fallthru
          _
        // Predicated region
        $region29: #{tpu_custom_call.1} parent=15 // pred_check
          %p365 = pneg %p133
        $region30: #{tpu_custom_call.1} parent=15 // pred_check_branch
          %367 = sbr.rel (%p365) target = $region32
        $region31: #{tpu_custom_call.1} parent=15 // pred_region
          %p368 = scmp.lt.s32.totalorder %s31, 3
          %s369 = scalar_select %p368, %s31, 3
          %s370 = smul.addr %s369, 4
          %s371 = smul.addr %s370, 8
          %s372 = scalar_lea.vmem %s3, %s371
        $region32: #{tpu_custom_call.1} parent=15 // pred_fallthru
          _
        // Predicated region
        $region33: #{tpu_custom_call.1} parent=15 // pred_check
          %p373 = pneg %p159
        $region34: #{tpu_custom_call.1} parent=15 // pred_check_branch
          %375 = sbr.rel (%p373) target = $region36
        $region35: #{tpu_custom_call.1} parent=15 // pred_region
          %p376 = scmp.lt.s32.totalorder %s31, 3
          %s377 = scalar_select %p376, %s31, 3
          %s378 = scalar_lea.vmem %s4, %s377
        $region36: #{tpu_custom_call.1} parent=15 // pred_fallthru
          _
        // Predicated region
        $region37: #{tpu_custom_call.1} parent=15 // pred_check
          %p379 = pneg %p185
        $region38: #{tpu_custom_call.1} parent=15 // pred_check_branch
          %381 = sbr.rel (%p379) target = $region40
        $region39: #{tpu_custom_call.1} parent=15 // pred_region
          %p382 = scmp.lt.s32.totalorder %s31, 3
          %s383 = scalar_select %p382, %s31, 3
          %s384 = smul.addr %s383, 4
          %s385 = smul.addr %s384, 8
          %s386 = scalar_lea.vmem %s5, %s385
        $region40: #{tpu_custom_call.1} parent=15 // pred_fallthru
          _
        // Predicated region
        $region41: #{tpu_custom_call.1} parent=15 // pred_check
          %p387 = pneg %p211
        $region42: #{tpu_custom_call.1} parent=15 // pred_check_branch
          %389 = sbr.rel (%p387) target = $region44
        $region43: #{tpu_custom_call.1} parent=15 // pred_region
          %p390 = scmp.lt.s32.totalorder %s31, 3
          %s391 = scalar_select %p390, %s31, 3
          %s392 = scalar_lea.vmem %s6, %s391
        $region44: #{tpu_custom_call.1} parent=15 // pred_fallthru
          _
        // Predicated region
        $region45: #{tpu_custom_call.1} parent=15 // pred_check
          %p393 = pneg %p237
        $region46: #{tpu_custom_call.1} parent=15 // pred_check_branch
          %395 = sbr.rel (%p393) target = $region48
        $region47: #{tpu_custom_call.1} parent=15 // pred_region
          %p396 = scmp.lt.s32.totalorder %s31, 3
          %s397 = scalar_select %p396, %s31, 3
          %s398 = smul.addr %s397, 4
          %s399 = smul.addr %s398, 8
          %s400 = scalar_lea.vmem %s7, %s399
        $region48: #{tpu_custom_call.1} parent=15 // pred_fallthru
          _
        // Predicated region
        $region49: #{tpu_custom_call.1} parent=15 // pred_check
          %p401 = pneg %p263
        $region50: #{tpu_custom_call.1} parent=15 // pred_check_branch
          %403 = sbr.rel (%p401) target = $region52
        $region51: #{tpu_custom_call.1} parent=15 // pred_region
          %p404 = scmp.lt.s32.totalorder %s31, 3
          %s405 = scalar_select %p404, %s31, 3
          %s406 = scalar_lea.vmem %s8, %s405
        $region52: #{tpu_custom_call.1} parent=15 // pred_fallthru
          _
      $region16: #{tpu_custom_call.1} parent=5 // pred_fallthru
        _
      %p407 = scmp.le.s32.totalorder 1, %s23
      %p408 = scmp.lt.s32.totalorder %s23, 9
      %p409 = pnand %p407, %p408
      %p410 = pneg %p409
      // Predicated region
      $region53: #{tpu_custom_call.1} parent=5 // pred_check
        _
      $region54: #{tpu_custom_call.1} parent=5 // pred_check_branch
        %412 = sbr.rel (%p409) target = $region56
      $region55: #{tpu_custom_call.1} parent=5 // pred_region
        %s413 = ssub.s32 %s23, 1
        %p414 = scmp.lt.s32.totalorder %s32, 1
        %s415 = scalar_select %p414, %s32, 1
        %s416 = smul.addr %s415, 8
        %s417 = scalar_lea.vmem %s0, %s416
        %p418 = pneg %p61
        %p419 = pneg %p58
        %p420 = scmp.lt.s32.totalorder %s32, 1
        %s421 = scalar_select %p420, %s32, 1
        %s422 = smul.addr %s421, 8
        %s423 = scalar_lea.vmem %s1, %s422
        %p424 = pneg %p87
        %p425 = pneg %p84
        %p426 = scmp.lt.s32.totalorder %s32, 1
        %s427 = scalar_select %p426, %s32, 1
        %s428 = smul.addr %s427, 8
        %s429 = scalar_lea.vmem %s2, %s428
        %p430 = pneg %p113
        %p431 = pneg %p110
        %p432 = scmp.lt.s32.totalorder %s33, 3
        %s433 = scalar_select %p432, %s33, 3
        %s434 = smul.addr %s433, 4
        %s435 = smul.addr %s434, 8
        %s436 = scalar_lea.vmem %s3, %s435
        %p437 = pneg %p139
        %p438 = pneg %p136
        %p439 = scmp.lt.s32.totalorder %s33, 3
        %s440 = scalar_select %p439, %s33, 3
        %s441 = scalar_lea.vmem %s4, %s440
        %p442 = pneg %p165
        %p443 = pneg %p162
        %p444 = scmp.lt.s32.totalorder %s33, 3
        %s445 = scalar_select %p444, %s33, 3
        %s446 = smul.addr %s445, 4
        %s447 = smul.addr %s446, 8
        %s448 = scalar_lea.vmem %s5, %s447
        %p449 = pneg %p191
        %p450 = pneg %p188
        %p451 = scmp.lt.s32.totalorder %s33, 3
        %s452 = scalar_select %p451, %s33, 3
        %s453 = scalar_lea.vmem %s6, %s452
        %p454 = pneg %p217
        %p455 = pneg %p214
        %p456 = scmp.lt.s32.totalorder %s33, 3
        %s457 = scalar_select %p456, %s33, 3
        %s458 = smul.addr %s457, 4
        %s459 = smul.addr %s458, 8
        %s460 = scalar_lea.vmem %s7, %s459
        %p461 = pneg %p243
        %p462 = pneg %p240
        %p463 = scmp.lt.s32.totalorder %s33, 3
        %s464 = scalar_select %p463, %s33, 3
        %s465 = scalar_lea.vmem %s8, %s464
        %p466 = pneg %p269
        %p467 = pneg %p266
        %p468 = pneg %p297
        %p469 = pneg %p294
        %s470 = sand.u32 %s284, 1
        %s471 = scalar_lea.sflag [#allocation3], %s470
        %s472 = sand.u32 %s284, 1
        %s473 = smul.addr %s472, 8
        %s474 = scalar_lea.vmem [#allocation2], %s473
        %p475 = pneg %p325
        %p476 = pneg %p322
        %s477 = sand.u32 %s312, 1
        %s478 = scalar_lea.sflag [#allocation5], %s477
        %s479 = sand.u32 %s312, 1
        %s480 = smul.addr %s479, 8
        %s481 = scalar_lea.vmem [#allocation4], %s480
        %p482 = scmp.lt.s32.totalorder %s32, 1
        %s483 = scalar_select %p482, %s32, 1
        %s484 = smul.addr %s483, 8
        %s485 = scalar_lea.vmem %s0, %s484
        %p486 = scmp.lt.s32.totalorder %s32, 1
        %s487 = scalar_select %p486, %s32, 1
        %s488 = smul.addr %s487, 8
        %s489 = scalar_lea.vmem %s1, %s488
        %p490 = scmp.lt.s32.totalorder %s32, 1
        %s491 = scalar_select %p490, %s32, 1
        %s492 = smul.addr %s491, 8
        %s493 = scalar_lea.vmem %s2, %s492
        %p494 = scmp.lt.s32.totalorder %s33, 3
        %s495 = scalar_select %p494, %s33, 3
        %s496 = smul.addr %s495, 4
        %s497 = smul.addr %s496, 8
        %s498 = scalar_lea.vmem %s3, %s497
        %p499 = scmp.lt.s32.totalorder %s33, 3
        %s500 = scalar_select %p499, %s33, 3
        %s501 = scalar_lea.vmem %s4, %s500
        %p502 = scmp.lt.s32.totalorder %s33, 3
        %s503 = scalar_select %p502, %s33, 3
        %s504 = smul.addr %s503, 4
        %s505 = smul.addr %s504, 8
        %s506 = scalar_lea.vmem %s5, %s505
        %p507 = scmp.lt.s32.totalorder %s33, 3
        %s508 = scalar_select %p507, %s33, 3
        %s509 = scalar_lea.vmem %s6, %s508
        %p510 = scmp.lt.s32.totalorder %s33, 3
        %s511 = scalar_select %p510, %s33, 3
        %s512 = smul.addr %s511, 4
        %s513 = smul.addr %s512, 8
        %s514 = scalar_lea.vmem %s7, %s513
        %p515 = scmp.lt.s32.totalorder %s33, 3
        %s516 = scalar_select %p515, %s33, 3
        %s517 = scalar_lea.vmem %s8, %s516
        %v518 = vld [vmem:[%s485] sm:$0xff]
        %v519 = vld [vmem:[%s489] sm:$0xff]
        %v520 = vld [vmem:[%s493] sm:$0xff]
        %v521 = vld [vmem:[%s498] sm:$0xff]
        %v522 = vld [vmem:[%s498 + $0x8] sm:$0xff]
        %v523 = vld [vmem:[%s498 + $0x10] sm:$0xff]
        %v524 = vld [vmem:[%s498 + $0x18] sm:$0xff]
        %v525 = vld [vmem:[%s501] sm:$0x1]
        %v527 = vperm.slane %v525, 0
        %vm529 = vcmask 261120
        %v531 = vsel %vm529, %v518, 0
        %533 = vmatpush.msra.mxu0 0.0
        %534 = vmatpush.msra.mxu0 0.0
        %535 = vmatpush.msra.mxu0 0.0
        %536 = vmatpush.msra.mxu0 0.0
        %537 = vmatpush.msra.mxu0 0.0
        %538 = vmatpush.msra.mxu0 0.0
        %539 = vmatpush.msra.mxu0 0.0
        %540 = vmatpush.msra.mxu0 0.0
        %541 = vmatpush.msra.mxu0 0.0
        %542 = vmatpush.msra.mxu0 0.0
        %543 = vmatpush.msra.mxu0 0.0
        %544 = vmatpush.msra.mxu0 0.0
        %545 = vmatpush.msra.mxu0 %v524
        %546 = vmatpush.msra.mxu0 %v523
        %547 = vmatpush.msra.mxu0 %v522
        %548 = vmatpush.msra.mxu0 %v521
        %549 = vmatmul.f32.gmra.mxu0 %v531
        %v550 = vpop.f32.mrf.mxu0
        %v551 = vadd.f32 %v527, %v550
        %552 = vdwg.mxu0
        %v553 = vld [vmem:[%s506] sm:$0xff]
        %v554 = vld [vmem:[%s506 + $0x8] sm:$0xff]
        %v555 = vld [vmem:[%s506 + $0x10] sm:$0xff]
        %v556 = vld [vmem:[%s506 + $0x18] sm:$0xff]
        %v557 = vld [vmem:[%s509] sm:$0x1]
        %v559 = vperm.slane %v557, 0
        %v562 = vsel %vm529, %v519, 0
        %564 = vmatpush.msra.mxu0 0.0
        %565 = vmatpush.msra.mxu0 0.0
        %566 = vmatpush.msra.mxu0 0.0
        %567 = vmatpush.msra.mxu0 0.0
        %568 = vmatpush.msra.mxu0 0.0
        %569 = vmatpush.msra.mxu0 0.0
        %570 = vmatpush.msra.mxu0 0.0
        %571 = vmatpush.msra.mxu0 0.0
        %572 = vmatpush.msra.mxu0 0.0
        %573 = vmatpush.msra.mxu0 0.0
        %574 = vmatpush.msra.mxu0 0.0
        %575 = vmatpush.msra.mxu0 0.0
        %576 = vmatpush.msra.mxu0 %v556
        %577 = vmatpush.msra.mxu0 %v555
        %578 = vmatpush.msra.mxu0 %v554
        %579 = vmatpush.msra.mxu0 %v553
        %580 = vmatmul.f32.gmra.mxu0 %v562
        %v581 = vpop.f32.mrf.mxu0
        %v582 = vadd.f32 %v559, %v581
        %583 = vdwg.mxu0
        %v584 = vld [vmem:[%s514] sm:$0xff]
        %v585 = vld [vmem:[%s514 + $0x8] sm:$0xff]
        %v586 = vld [vmem:[%s514 + $0x10] sm:$0xff]
        %v587 = vld [vmem:[%s514 + $0x18] sm:$0xff]
        %v588 = vld [vmem:[%s517] sm:$0x1]
        %v590 = vperm.slane %v588, 0
        %v593 = vsel %vm529, %v520, 0
        %595 = vmatpush.msra.mxu0 0.0
        %596 = vmatpush.msra.mxu0 0.0
        %597 = vmatpush.msra.mxu0 0.0
        %598 = vmatpush.msra.mxu0 0.0
        %599 = vmatpush.msra.mxu0 0.0
        %600 = vmatpush.msra.mxu0 0.0
        %601 = vmatpush.msra.mxu0 0.0
        %602 = vmatpush.msra.mxu0 0.0
        %603 = vmatpush.msra.mxu0 0.0
        %604 = vmatpush.msra.mxu0 0.0
        %605 = vmatpush.msra.mxu0 0.0
        %606 = vmatpush.msra.mxu0 0.0
        %607 = vmatpush.msra.mxu0 %v587
        %608 = vmatpush.msra.mxu0 %v586
        %609 = vmatpush.msra.mxu0 %v585
        %610 = vmatpush.msra.mxu0 %v584
        %611 = vmatmul.f32.gmra.mxu0 %v593
        %v612 = vpop.f32.mrf.mxu0
        %v613 = vadd.f32 %v590, %v612
        %614 = vdwg.mxu0
        %vm615 = vcmask 64512
        %v617 = vsel %vm615, %v551, 0
        %v620 = vsel %vm615, %v582, 0
        %622 = vmatpush.xpose.msra.mxu0 0.0
        %623 = vmatpush.xpose.msra.mxu0 0.0
        %624 = vmatpush.xpose.msra.mxu0 0.0
        %625 = vmatpush.xpose.msra.mxu0 0.0
        %626 = vmatpush.xpose.msra.mxu0 0.0
        %627 = vmatpush.xpose.msra.mxu0 0.0
        %628 = vmatpush.xpose.msra.mxu0 0.0
        %629 = vmatpush.xpose.msra.mxu0 0.0
        %630 = vmatpush.xpose.msra.mxu0 0.0
        %631 = vmatpush.xpose.msra.mxu0 0.0
        %632 = vmatpush.xpose.msra.mxu0 0.0
        %633 = vmatpush.xpose.msra.mxu0 0.0
        %634 = vmatpush.xpose.msra.mxu0 0.0
        %635 = vmatpush.xpose.msra.mxu0 0.0
        %636 = vmatpush.xpose.msra.mxu0 0.0
        %637 = vmatpush.xpose.msra.mxu0 %v620
        %638 = vmatmul.f32.gmra.mxu0 %v617
        %v639 = vpop.f32.mrf.mxu0
        %v640 = vadd.f32 0.0, %v639
        %641 = vdwg.mxu0
        %v642 = vmul.f32 %v640, 0.35355338
        %643 = vst.msk [vmem:[%s481] sm:$0xff] %vm615, %v642
        %v644 = vsel %vm615, %v642, -inf
        %645 = vmax.xlane.f32.xlu0 %v644
        %v646 = vpop.xlane.xlu0 %645
        %v647 = vsub.f32 %v642, %v646
        %v648 = vmul.f32 %v647, 1.442695
        %v649 = vpow.pop %v648
        %v650 = vsel %vm615, %v649, 0.0
        %651 = vadd.xlane.f32.xlu0 %v650
        %v652 = vpop.xlane.xlu0 %651
        %v653 = vrcp.pop %v652
        %v654 = vmul.f32 %v652, %v653
        %v655 = vsub.f32 1.0, %v654
        %v656 = vmul.f32 %v653, %v655
        %v657 = vadd.f32 %v653, %v656
        %vm658 = vweird.f32 %v652
        %vm659 = vweird.f32 %v653
        %vm660 = vmor %vm658, %vm659
        %v661 = vsel %vm660, %v653, %v657
        %v662 = vand.u32 2147483647, %v652
        %vm663 = vcmp.eq.f32.partialorder %v662, 8.507059e+37
        %v664 = vand.u32 %v652, 2147483648
        %v665 = vor.u32 1.1754944e-38, %v664
        %v666 = vsel %vm663, %v665, %v661
        %v667 = vmul.f32 %v649, %v666
        %v669 = vsel %vm615, %v667, 0
        %671 = vmatpush.msra.mxu0 0.0
        %672 = vmatpush.msra.mxu0 0.0
        %673 = vmatpush.msra.mxu0 0.0
        %674 = vmatpush.msra.mxu0 0.0
        %675 = vmatpush.msra.mxu0 0.0
        %676 = vmatpush.msra.mxu0 0.0
        %677 = vmatpush.msra.mxu0 0.0
        %678 = vmatpush.msra.mxu0 0.0
        %679 = vmatpush.msra.mxu0 0.0
        %680 = vmatpush.msra.mxu0 0.0
        %681 = vmatpush.msra.mxu0 0.0
        %682 = vmatpush.msra.mxu0 0.0
        %683 = vmatpush.msra.mxu0 0.0
        %684 = vmatpush.msra.mxu0 0.0
        %685 = vmatpush.msra.mxu0 0.0
        %686 = vmatpush.msra.mxu0 %v613
        %687 = vmatmul.f32.gmra.mxu0 %v669
        %v688 = vpop.f32.mrf.mxu0
        %v689 = vadd.f32 0.0, %v688
        %690 = vdwg.mxu0
        %691 = vst.msk [vmem:[%s474] sm:$0xff] %vm615, %v689
        %s692 = sand.u32 %s284, 1
        %s693 = scalar_lea.sflag [#allocation3], %s692
        %s694 = sand.u32 %s284, 1
        %s695 = smul.addr %s694, 8
        %s696 = scalar_lea.vmem [#allocation2], %s695
        %s697 = sand.u32 %s312, 1
        %s698 = scalar_lea.sflag [#allocation5], %s697
        %s699 = sand.u32 %s312, 1
        %s700 = smul.addr %s699, 8
        %s701 = scalar_lea.vmem [#allocation4], %s700
        // Predicated region
        $region57: #{tpu_custom_call.1} parent=55 // pred_check
          %p702 = pneg %p294
        $region58: #{tpu_custom_call.1} parent=55 // pred_check_branch
          %704 = sbr.rel (%p702) target = $region60
        $region59: #{tpu_custom_call.1} parent=55 // pred_region
          %706 = vsyncadd %s693, 0
          %s707 = smul.addr %s32, 4
          %s708 = sadd.s32 %s33, %s707
          %s709 = smul.addr %s708, 8
          %s710 = scalar_lea.hbm %s9, %s709
          %s712 = sshll.u32 %s696, 4
          %s713 = int_to_ptr.vmem [resolvable:$true] %s712
          %s714 = sshll.u32 %s710, 4
          %s715 = int_to_ptr.hbm [resolvable:$true] %s714
          %717 = dma.vmem_to_hbm [thread:$0]  %s713, 128, %s715, %s693
        $region60: #{tpu_custom_call.1} parent=55 // pred_fallthru
          _
        // Predicated region
        $region61: #{tpu_custom_call.1} parent=55 // pred_check
          %p718 = pneg %p322
        $region62: #{tpu_custom_call.1} parent=55 // pred_check_branch
          %720 = sbr.rel (%p718) target = $region64
        $region63: #{tpu_custom_call.1} parent=55 // pred_region
          %722 = vsyncadd %s698, 0
          %s723 = smul.addr %s32, 4
          %s724 = sadd.s32 %s33, %s723
          %s725 = smul.addr %s724, 8
          %s726 = scalar_lea.hbm %s10, %s725
          %s728 = sshll.u32 %s701, 4
          %s729 = int_to_ptr.vmem [resolvable:$true] %s728
          %s730 = sshll.u32 %s726, 4
          %s731 = int_to_ptr.hbm [resolvable:$true] %s730
          %733 = dma.vmem_to_hbm [thread:$0]  %s729, 128, %s731, %s698
        $region64: #{tpu_custom_call.1} parent=55 // pred_fallthru
          _
      $region56: #{tpu_custom_call.1} parent=5 // pred_fallthru
        _
      %p734 = scmp.le.s32.totalorder 2, %s23
      // Predicated region
      $region65: #{tpu_custom_call.1} parent=5 // pred_check
        %p735 = pneg %p734
      $region66: #{tpu_custom_call.1} parent=5 // pred_check_branch
        %737 = sbr.rel (%p735) target = $region68
      $region67: #{tpu_custom_call.1} parent=5 // pred_region
        %s738 = ssub.s32 %s23, 2
        // Predicated region
        $region69: #{tpu_custom_call.1} parent=67 // pred_check
          %p739 = pneg %p300
        $region70: #{tpu_custom_call.1} parent=67 // pred_check_branch
          %741 = sbr.rel (%p739) target = $region72
        $region71: #{tpu_custom_call.1} parent=67 // pred_region
          %s742 = sand.u32 %s285, 1
          %s743 = scalar_lea.sflag [#allocation3], %s742
          %s744 = sand.u32 %s285, 1
          %s745 = smul.addr %s744, 8
          %s746 = scalar_lea.vmem [#allocation2], %s745
          %748 = dma.done %s743, 128
        $region72: #{tpu_custom_call.1} parent=67 // pred_fallthru
          _
        // Predicated region
        $region73: #{tpu_custom_call.1} parent=67 // pred_check
          %p749 = pneg %p328
        $region74: #{tpu_custom_call.1} parent=67 // pred_check_branch
          %751 = sbr.rel (%p749) target = $region76
        $region75: #{tpu_custom_call.1} parent=67 // pred_region
          %s752 = sand.u32 %s313, 1
          %s753 = scalar_lea.sflag [#allocation5], %s752
          %s754 = sand.u32 %s313, 1
          %s755 = smul.addr %s754, 8
          %s756 = scalar_lea.vmem [#allocation4], %s755
          %758 = dma.done %s753, 128
        $region76: #{tpu_custom_call.1} parent=67 // pred_fallthru
          _
      $region68: #{tpu_custom_call.1} parent=5 // pred_fallthru
        _
    $region6: #{tpu_custom_call.1} parent=1 // loop_footer
      %s27 = sadd.s32 1, %s23
    $region7: #{tpu_custom_call.1} parent=1 // loop_footer_branch
      %22 = sbr.rel target = $region3
    $region8: #{tpu_custom_call.1} parent=1 // loop_exit
      _
    %759 = vsyncpa [#allocation3], 1
    %s760 = scalar_lea.sflag [#allocation3], 1
    %761 = vsyncpa %s760, 1
    %762 = vsyncpa [#allocation5], 1
    %s763 = scalar_lea.sflag [#allocation5], 1
    %764 = vsyncpa %s763, 1

</llo_original>
